<compile_context>
chip_gen: v7x
topology: tpu7x:2x2x1
jax: 0.10.0
libtpu: 0.0.40
codegen_flags: <defaults>
</compile_context>

<pallas_src>
import functools
import math

import jax
import jax.numpy as jnp
from jax import lax
from jax.experimental import pallas as pl
from jax.experimental.pallas import tpu as pltpu

EPS_PDNORM = 1e-3   # norm_fn: PDNorm -> per-condition BatchNorm1d(eps=1e-3)
EPS_PBN = 1e-5      # PointBatchNorm (nn.BatchNorm1d default)


def _tpu_kind():
    try:
        return jax.devices()[0].device_kind.lower()
    except Exception:
        return ""


_KIND = _tpu_kind()

# bf16 matmul inputs on v6e/v7x (native MXU format, f32 accumulation); f32 on
# older chips (v5e has no bf16 VPU and its f32 MXU path is fine).
MM_DTYPE = jnp.bfloat16 if (("v6" in _KIND) or ("v7" in _KIND)) else jnp.float32

# The [S, N, *] grouped tensors are written and re-read through HBM between the
# GVA passes -> store them in bf16 (halves the dominant HBM traffic).
STORE_DTYPE = jnp.bfloat16


def _vmem_limit_bytes():
    cap = None
    try:
        cap = int(pltpu.get_tpu_info().vmem_capacity_bytes)
    except Exception:
        cap = None
    if cap is None:
        cap = (64 if "v7" in _KIND else 128) * 1024 * 1024
    return min(96 * 1024 * 1024, (cap * 3) // 4)   # 48 MiB on v7x, 96 MiB else


_VMEM_LIMIT = _vmem_limit_bytes()


def _compiler_params():
    return pltpu.CompilerParams(dimension_semantics=("parallel",),
                                vmem_limit_bytes=_VMEM_LIMIT)


def _round_up(x, m):
    return -(-x // m) * m


def _choose_tiling(n, cap=256):
    """Row-tile size + padded row count.  Large tiles amortize the ~0.35 us
    per-grid-step overhead; keep >=2 blocks whenever possible so the
    ("parallel",) grid axis can shard across both TensorCores on v7x."""
    tn = cap
    while tn > 8 and n <= tn:
        tn //= 2
    tn = max(tn, 8)
    return tn, _round_up(n, tn)


def _pad_rows(x, n_pad, value=0):
    n = x.shape[0]
    if n_pad == n:
        return x
    widths = [(0, n_pad - n)] + [(0, 0)] * (x.ndim - 1)
    return jnp.pad(x, widths, constant_values=value)


def _mm(a, b):
    return jnp.dot(a.astype(MM_DTYPE), b.astype(MM_DTYPE),
                   preferred_element_type=jnp.float32)


def _pack_lanes(parts, width):
    """Concatenate along lanes and zero-pad to `width` (one dense store)."""
    cur = sum(int(p.shape[1]) for p in parts)
    if width > cur:
        parts = list(parts) + [jnp.zeros((parts[0].shape[0], width - cur),
                                         jnp.float32)]
    return parts[0] if len(parts) == 1 else jnp.concatenate(parts, axis=1)


def _stats_rows(z):
    """Per-tile BN partials as a single [2, C] block (sum, sum_sq)."""
    return jnp.concatenate([jnp.sum(z, axis=0, keepdims=True),
                            jnp.sum(z * z, axis=0, keepdims=True)], axis=0)


# -----------------------------------------------------------------------------
# Generic fused stage:
#   [x -> scale/shift norm] -> [+residual] -> [relu] -> (emit activation)
#   -> [matmul (+bias)] -> (emit y, masked per-tile partial BN stats of y)
# -----------------------------------------------------------------------------
@functools.lru_cache(maxsize=None)
def _make_stage_kernel(pre_norm, pre_residual, pre_relu, emit_pre,
                       has_matmul, has_bias, has_stats):
    def kernel(*refs):
        refs = list(refs)
        y = refs.pop(0)[...]
        norm_ref = refs.pop(0) if pre_norm else None
        res_ref = refs.pop(0) if pre_residual else None
        w_ref = refs.pop(0) if has_matmul else None
        b_ref = refs.pop(0) if has_bias else None
        rmask_ref = refs.pop(0) if has_stats else None
        if pre_norm:
            y = y * norm_ref[0:1, :] + norm_ref[1:2, :]
        if pre_residual:
            y = y + res_ref[...]
        if pre_relu:
            y = jnp.maximum(y, 0.0)
        if emit_pre:
            refs.pop(0)[...] = y
        if has_matmul:
            z = _mm(y, w_ref[...])
            if has_bias:
                z = z + b_ref[...]
            refs.pop(0)[...] = z
            if has_stats:
                refs.pop(0)[...] = _stats_rows(z * rmask_ref[...])
    return kernel


def stage_call(x, *, tn, norm=None, residual=None, w=None, b=None,
               relu=False, emit_pre=False, rowmask=None):
    n, cin = x.shape
    grid = (n // tn,)
    want_stats = (rowmask is not None) and (w is not None)

    args = [x]
    in_specs = [pl.BlockSpec((tn, cin), lambda i: (i, 0))]
    if norm is not None:
        args.append(norm)
        in_specs.append(pl.BlockSpec((2, cin), lambda i: (0, 0)))
    if residual is not None:
        args.append(residual)
        in_specs.append(pl.BlockSpec((tn, cin), lambda i: (i, 0)))
    cout = None
    if w is not None:
        cout = w.shape[1]
        args.append(w)
        in_specs.append(pl.BlockSpec((cin, cout), lambda i: (0, 0)))
        if b is not None:
            args.append(b.reshape(1, cout))
            in_specs.append(pl.BlockSpec((1, cout), lambda i: (0, 0)))
    if want_stats:
        args.append(rowmask)
        in_specs.append(pl.BlockSpec((tn, 1), lambda i: (i, 0)))

    out_shape, out_specs = [], []
    if emit_pre:
        out_shape.append(jax.ShapeDtypeStruct((n, cin), jnp.float32))
        out_specs.append(pl.BlockSpec((tn, cin), lambda i: (i, 0)))
    if w is not None:
        out_shape.append(jax.ShapeDtypeStruct((n, cout), jnp.float32))
        out_specs.append(pl.BlockSpec((tn, cout), lambda i: (i, 0)))
        if want_stats:
            out_shape.append(jax.ShapeDtypeStruct((grid[0], 2, cout),
                                                  jnp.float32))
            out_specs.append(pl.BlockSpec((None, 2, cout),
                                          lambda i: (i, 0, 0)))

    kernel = _make_stage_kernel(norm is not None, residual is not None, relu,
                                emit_pre, w is not None, b is not None,
                                want_stats)
    return pl.pallas_call(
        kernel, grid=grid, in_specs=in_specs, out_specs=out_specs,
        out_shape=tuple(out_shape), compiler_params=_compiler_params(),
    )(*args)


# -----------------------------------------------------------------------------
# qkv split: q/k PointBatchNorm + ReLU, v passthrough; build the lane-aligned
# gather table  [key | value | coord | 0...]  (key/value at lane 0, item 6).
# -----------------------------------------------------------------------------
@functools.lru_cache(maxsize=None)
def _make_split_kernel(C, WT):
    def kernel(qkv_ref, coord_ref, norm_ref, q_ref, table_ref):
        y = qkv_ref[...] * norm_ref[0:1, :] + norm_ref[1:2, :]
        lane = lax.broadcasted_iota(jnp.int32, y.shape, 1)
        y = jnp.where(lane < 2 * C, jnp.maximum(y, 0.0), y)   # ReLU on q,k only
        q_ref[...] = y[:, 0:C]
        table_ref[...] = _pack_lanes([y[:, C:3 * C], coord_ref[...]], WT)
    return kernel


def split_qkv_call(qkv, coord, norm_qk, C, tn):
    n, cp3 = qkv.shape
    wt = _round_up(2 * C + 3, 128)
    grid = (n // tn,)
    return pl.pallas_call(
        _make_split_kernel(C, wt),
        grid=grid,
        in_specs=[pl.BlockSpec((tn, cp3), lambda i: (i, 0)),
                  pl.BlockSpec((tn, 3), lambda i: (i, 0)),
                  pl.BlockSpec((2, cp3), lambda i: (0, 0))],
        out_specs=[pl.BlockSpec((tn, C), lambda i: (i, 0)),
                   pl.BlockSpec((tn, wt), lambda i: (i, 0))],
        out_shape=(jax.ShapeDtypeStruct((n, C), jnp.float32),
                   jax.ShapeDtypeStruct((n, wt), jnp.float32)),
        compiler_params=_compiler_params(),
    )(qkv, coord, norm_qk)


# -----------------------------------------------------------------------------
# GVA pass 1: index-driven gather (scalar-prefetched knn indices) + the first
# layer of linear_p_bias (Linear(3,C) on the VPU) + its masked BN partials.
# Output is a single packed [S, N, 128k] bf16 tensor:  [key | value | hpe | 0].
# -----------------------------------------------------------------------------
@functools.lru_cache(maxsize=None)
def _make_gva1_kernel(S, C, TN, WT, PK):
    def kernel(idx_sref, table_ref, coord_ref, mask_ref, rmask_ref, pe1_ref,
               grp_ref, st_ref, gscr):
        base = pl.program_id(0) * TN

        # Pass 1: scalar-indexed gather.  One aligned, full-width row copy per
        # (query, neighbour); masking / splitting is vectorized in pass 2.
        def gather_body(j, carry):
            for s in range(S):
                nbr = idx_sref[(base + j) * S + s]
                safe = jnp.maximum(nbr, 0)
                gscr[s, pl.ds(j, 1), :] = table_ref[pl.ds(safe, 1), :]
            return carry

        lax.fori_loop(0, TN, gather_body, 0)

        # Pass 2: per-neighbour vectorized split + Linear(3, C) (K=3 -> VPU).
        coord_q = coord_ref[...]
        rmask = rmask_ref[...]
        w0 = pe1_ref[0:1, :]
        w1 = pe1_ref[1:2, :]
        w2 = pe1_ref[2:3, :]
        b1 = pe1_ref[3:4, :]
        ssum = jnp.zeros((1, C), jnp.float32)
        ssq = jnp.zeros((1, C), jnp.float32)
        for s in range(S):
            row = gscr[s]                                  # [TN, WT] f32
            vcol = mask_ref[:, s:s + 1]                    # neighbour validity
            kv = row[:, 0:2 * C] * vcol                    # masked key|value
            pos = (row[:, 2 * C:2 * C + 3] - coord_q) * vcol
            h = pos[:, 0:1] * w0 + pos[:, 1:2] * w1 + pos[:, 2:3] * w2 + b1
            grp_ref[s] = _pack_lanes([kv, h], PK).astype(STORE_DTYPE)
            hm = h * rmask                                 # mask padded rows
            ssum = ssum + jnp.sum(hm, axis=0, keepdims=True)
            ssq = ssq + jnp.sum(hm * hm, axis=0, keepdims=True)
        st_ref[...] = jnp.concatenate([ssum, ssq], axis=0)

    return kernel


def gva1_call(idx_flat, table, coord, mask, rowmask, pe1_pack, S, tn):
    n, wt = table.shape
    C = pe1_pack.shape[1]
    pk = _round_up(3 * C, 128)
    grid = (n // tn,)
    # TODO(synk): for very large point clouds keep the table in HBM
    # (memory_space=pl.ANY) and gather rows with a ring of async DMAs, and feed
    # the knn indices as per-tile SMEM blocks instead of one scalar-prefetch
    # array (SMEM size / 64-MiB-VMEM limits on v7x).
    gs = pltpu.PrefetchScalarGridSpec(
        num_scalar_prefetch=1,
        grid=grid,
        in_specs=[pl.BlockSpec((n, wt), lambda i, idx: (0, 0)),   # resident
                  pl.BlockSpec((tn, 3), lambda i, idx: (i, 0)),
                  pl.BlockSpec((tn, S), lambda i, idx: (i, 0)),
                  pl.BlockSpec((tn, 1), lambda i, idx: (i, 0)),
                  pl.BlockSpec((4, C), lambda i, idx: (0, 0))],
        out_specs=[pl.BlockSpec((S, tn, pk), lambda i, idx: (0, i, 0)),
                   pl.BlockSpec((None, 2, C), lambda i, idx: (i, 0, 0))],
        scratch_shapes=[pltpu.VMEM((S, tn, wt), jnp.float32)],
    )
    return pl.pallas_call(
        _make_gva1_kernel(S, C, tn, wt, pk),
        grid_spec=gs,
        out_shape=(jax.ShapeDtypeStruct((S, n, pk), STORE_DTYPE),
                   jax.ShapeDtypeStruct((grid[0], 2, C), jnp.float32)),
        compiler_params=_compiler_params(),
    )(idx_flat, table, coord, mask, rowmask, pe1_pack)


# -----------------------------------------------------------------------------
# GVA pass 2: finish linear_p_bias (BN + ReLU + Linear(C,C)), relation_qk,
# value + peb, first layer of weight_encoding (Linear(C,G)) + masked BN stats.
# Matmul M is one full row tile per neighbour (weights cast/hoisted once);
# output is a single packed [S, N, 128k] bf16 tensor: [vpe | hwe | 0].
# -----------------------------------------------------------------------------
@functools.lru_cache(maxsize=None)
def _make_gva2_kernel(S, C, G, TN, PK, PV):
    def kernel(grp_ref, q_ref, rmask_ref, pvec_ref, wp2_ref, wwe1_ref,
               bwe1_ref, vh_ref, st_ref):
        q = q_ref[...]
        rmask = rmask_ref[...]
        pe_scale = pvec_ref[0:1, :]
        pe_shift = pvec_ref[1:2, :]
        bp2 = pvec_ref[2:3, :]
        wp2 = wp2_ref[...].astype(MM_DTYPE)     # hoisted weight loads / casts
        wwe1 = wwe1_ref[...].astype(MM_DTYPE)
        bwe1 = bwe1_ref[...]
        ssum = jnp.zeros((1, G), jnp.float32)
        ssq = jnp.zeros((1, G), jnp.float32)
        for s in range(S):
            row = grp_ref[s].astype(jnp.float32)           # [TN, PK]
            key = row[:, 0:C]
            val = row[:, C:2 * C]
            hpe = row[:, 2 * C:3 * C]
            h = jnp.maximum(hpe * pe_scale + pe_shift, 0.0)
            peb = jnp.dot(h.astype(MM_DTYPE), wp2,
                          preferred_element_type=jnp.float32) + bp2
            rel = key - q + peb                            # key - query + peb
            vpe = val + peb                                # value + peb
            hw = jnp.dot(rel.astype(MM_DTYPE), wwe1,
                         preferred_element_type=jnp.float32) + bwe1
            vh_ref[s] = _pack_lanes([vpe, hw], PV).astype(STORE_DTYPE)
            hwm = hw * rmask                               # mask padded rows
            ssum = ssum + jnp.sum(hwm, axis=0, keepdims=True)
            ssq = ssq + jnp.sum(hwm * hwm, axis=0, keepdims=True)
        st_ref[...] = jnp.concatenate([ssum, ssq], axis=0)

    return kernel


def gva2_call(grp, q, rowmask, pvec, wp2, wwe1, bwe1, S, tn):
    _, n, pk = grp.shape
    C = wp2.shape[0]
    G = wwe1.shape[1]
    pv = _round_up(C + G, 128)
    grid = (n // tn,)
    return pl.pallas_call(
        _make_gva2_kernel(S, C, G, tn, pk, pv),
        grid=grid,
        in_specs=[pl.BlockSpec((S, tn, pk), lambda i: (0, i, 0)),
                  pl.BlockSpec((tn, C), lambda i: (i, 0)),
                  pl.BlockSpec((tn, 1), lambda i: (i, 0)),
                  pl.BlockSpec((3, C), lambda i: (0, 0)),
                  pl.BlockSpec((C, C), lambda i: (0, 0)),
                  pl.BlockSpec((C, G), lambda i: (0, 0)),
                  pl.BlockSpec((1, G), lambda i: (0, 0))],
        out_specs=[pl.BlockSpec((S, tn, pv), lambda i: (0, i, 0)),
                   pl.BlockSpec((None, 2, G), lambda i: (i, 0, 0))],
        out_shape=(jax.ShapeDtypeStruct((S, n, pv), STORE_DTYPE),
                   jax.ShapeDtypeStruct((grid[0], 2, G), jnp.float32)),
        compiler_params=_compiler_params(),
    )(grp, q, rowmask, pvec, wp2, wwe1, bwe1)


# -----------------------------------------------------------------------------
# GVA pass 3: weight_encoding tail (BN+ReLU+Linear(G,G), loop-invariant rows
# hoisted), neighbour softmax with per-query max (one exp per neighbour),
# post-softmax masking, lane-dense register accumulation of the grouped
# weighted sum, plus BN partials of the attention output (for norm2).
# -----------------------------------------------------------------------------
@functools.lru_cache(maxsize=None)
def _make_gva3_kernel(S, C, G, TN, PV):
    I = C // G

    def kernel(vh_ref, mask_ref, pg_ref, out_ref, st_ref):
        we_scale = pg_ref[G:G + 1, :]                      # hoisted (item 3)
        we_shift = pg_ref[G + 1:G + 2, :]
        bwe2 = pg_ref[G + 2:G + 3, :]
        wrows = [pg_ref[g:g + 1, :] for g in range(G)]

        def logits(hw):
            # Linear(G, G): K=G tiny -> VPU broadcast-FMA; recomputed in
            # pass 2 instead of stored in a narrow-lane scratch (item 2).
            h = jnp.maximum(hw * we_scale + we_shift, 0.0)
            w = bwe2
            for g in range(G):
                w = w + h[:, g:g + 1] * wrows[g]
            return w

        # pass 1: per-(query, group) max over neighbours (VPU only, no exp)
        m = None
        for s in range(S):
            w = logits(vh_ref[s][:, C:C + G].astype(jnp.float32))
            m = w if m is None else jnp.maximum(m, w)

        # group -> channel expansion matrix; one tiny MXU op per use keeps the
        # accumulation lane-dense (no per-(s, g) sub-slice RMWs, item 1).
        gidx = lax.broadcasted_iota(jnp.int32, (G, C), 0)
        cidx = lax.broadcasted_iota(jnp.int32, (G, C), 1)
        expand = (cidx // I == gidx).astype(jnp.float32)   # [G, C]

        # pass 2: one exp per neighbour; register accumulation
        denom = jnp.zeros((TN, G), jnp.float32)
        acc = jnp.zeros((TN, C), jnp.float32)
        for s in range(S):
            row = vh_ref[s].astype(jnp.float32)            # [TN, PV]
            e = jnp.exp(logits(row[:, C:C + G]) - m)
            denom = denom + e
            a = e * mask_ref[:, s:s + 1]                   # mask AFTER softmax
            a_full = jnp.dot(a, expand, preferred_element_type=jnp.float32)
            acc = acc + row[:, 0:C] * a_full
        rden = jnp.dot(pl.reciprocal(denom, approx=True), expand,
                       preferred_element_type=jnp.float32)
        res = acc * rden
        out_ref[...] = res
        st_ref[...] = _stats_rows(res)

    return kernel


def gva3_call(vh, mask, pg, C, tn):
    S, n, pv = vh.shape
    G = pg.shape[1]
    grid = (n // tn,)
    return pl.pallas_call(
        _make_gva3_kernel(S, C, G, tn, pv),
        grid=grid,
        in_specs=[pl.BlockSpec((S, tn, pv), lambda i: (0, i, 0)),
                  pl.BlockSpec((tn, S), lambda i: (i, 0)),
                  pl.BlockSpec((G + 3, G), lambda i: (0, 0))],
        out_specs=[pl.BlockSpec((tn, C), lambda i: (i, 0)),
                   pl.BlockSpec((None, 2, C), lambda i: (i, 0, 0))],
        out_shape=(jax.ShapeDtypeStruct((n, C), jnp.float32),
                   jax.ShapeDtypeStruct((grid[0], 2, C), jnp.float32)),
        compiler_params=_compiler_params(),
    )(vh, mask, pg)


# -----------------------------------------------------------------------------
# Wrapper-side glue: BN-statistic finalization, knn, params, forward.
# -----------------------------------------------------------------------------
def _bn_scale_shift(stats, count, gamma, beta, eps):
    # NOTE: sum/sum_sq in f32 can cancel for very large N; acceptable here.
    s = jnp.sum(stats, axis=0)                      # [2, C] = (sum, sum_sq)
    mean = s[0] / count
    var = jnp.maximum(s[1] / count - mean * mean, 0.0)
    scale = gamma * lax.rsqrt(var + eps)
    shift = beta - mean * scale
    return jnp.stack([scale, shift], axis=0)        # [2, C]


def _qkv_norm(stats, count, blk, C, cp3):
    s = jnp.sum(stats, axis=0)
    mean = s[0] / count
    var = jnp.maximum(s[1] / count - mean * mean, 0.0)
    rstd = lax.rsqrt(var + EPS_PBN)
    gamma = jnp.concatenate([blk["q_bn_g"], blk["k_bn_g"],
                             jnp.ones((cp3 - 2 * C,), jnp.float32)])
    beta = jnp.concatenate([blk["q_bn_b"], blk["k_bn_b"],
                            jnp.zeros((cp3 - 2 * C,), jnp.float32)])
    scale = gamma * rstd
    shift = beta - mean * scale
    ident = jnp.arange(cp3) >= 2 * C                # v (and pad) lanes: identity
    scale = jnp.where(ident, 1.0, scale)
    shift = jnp.where(ident, 0.0, shift)
    return jnp.stack([scale, shift], axis=0)        # [2, cp3]


def knn_query(k, coord, offset):
    # TODO(synk): pointops.knn_query (top-k neighbour search) stays in plain
    # JAX; a dense N x N top-k has no clean Pallas TPU equivalent at these sizes.
    n = coord.shape[0]
    batch_id = jnp.sum(jnp.arange(n)[:, None] >= offset[None, :], axis=1)
    d2 = jnp.sum((coord[:, None, :] - coord[None, :, :]) ** 2, axis=-1)
    same = batch_id[:, None] == batch_id[None, :]
    d2 = jnp.where(same, d2, jnp.inf)
    vals, idx = lax.top_k(-d2, k)
    idx = jnp.where(jnp.isinf(vals), -1, idx)       # cross-batch picks -> invalid
    return idx.astype(jnp.int32)


def _init_linear(key, fan_in, fan_out, bias=True):
    kw, kb = jax.random.split(key)
    bound = 1.0 / math.sqrt(fan_in)
    w = jax.random.uniform(kw, (fan_in, fan_out), jnp.float32, -bound, bound)
    b = (jax.random.uniform(kb, (fan_out,), jnp.float32, -bound, bound)
         if bias else None)
    return w, b


def init_params(key, depth, in_ch, C, G, num_cond=3):
    cp3 = _round_up(3 * C, 128)
    keys = jax.random.split(key, 1 + max(depth, 1))
    proj_w, _ = _init_linear(keys[0], in_ch, C, bias=False)
    params = {"proj_w": proj_w,
              "proj_norm_g": jnp.ones((num_cond, C), jnp.float32),
              "proj_norm_b": jnp.zeros((num_cond, C), jnp.float32),
              "blocks": []}
    for d in range(depth):
        bk = jax.random.split(keys[1 + d], 9)
        fc1_w, _ = _init_linear(bk[0], C, C, bias=False)
        q_w, q_b = _init_linear(bk[1], C, C)
        k_w, k_b = _init_linear(bk[2], C, C)
        v_w, v_b = _init_linear(bk[3], C, C)
        pe_w1, pe_b1 = _init_linear(bk[4], 3, C)
        pe_w2, pe_b2 = _init_linear(bk[5], C, C)
        we_w1, we_b1 = _init_linear(bk[6], C, G)
        we_w2, we_b2 = _init_linear(bk[7], G, G)
        fc3_w, _ = _init_linear(bk[8], C, C, bias=False)
        qkv_w = jnp.concatenate([q_w, k_w, v_w], axis=1)          # [C, 3C]
        qkv_b = jnp.concatenate([q_b, k_b, v_b], axis=0)          # [3C]
        if cp3 > 3 * C:                                            # lane-pad
            qkv_w = jnp.pad(qkv_w, ((0, 0), (0, cp3 - 3 * C)))
            qkv_b = jnp.pad(qkv_b, (0, cp3 - 3 * C))
        blk = {
            "fc1_w": fc1_w, "fc3_w": fc3_w,
            "norm1_g": jnp.ones((num_cond, C), jnp.float32),
            "norm1_b": jnp.zeros((num_cond, C), jnp.float32),
            "norm2_g": jnp.ones((num_cond, C), jnp.float32),
            "norm2_b": jnp.zeros((num_cond, C), jnp.float32),
            "norm3_g": jnp.ones((num_cond, C), jnp.float32),
            "norm3_b": jnp.zeros((num_cond, C), jnp.float32),
            "qkv_w": qkv_w, "qkv_b": qkv_b,                        # fused q|k|v
            "q_bn_g": jnp.ones((C,), jnp.float32),
            "q_bn_b": jnp.zeros((C,), jnp.float32),
            "k_bn_g": jnp.ones((C,), jnp.float32),
            "k_bn_b": jnp.zeros((C,), jnp.float32),
            # packed first layer of linear_p_bias: rows 0..2 = W[3,C], row 3 = bias
            "pe1_pack": jnp.concatenate([pe_w1, pe_b1[None, :]], axis=0),
            "pe_bn_g": jnp.ones((C,), jnp.float32),
            "pe_bn_b": jnp.zeros((C,), jnp.float32),
            "pe_w2": pe_w2, "pe_b2": pe_b2,
            "we_w1": we_w1, "we_b1": we_b1,
            "we_bn_g": jnp.ones((G,), jnp.float32),
            "we_bn_b": jnp.zeros((G,), jnp.float32),
            "we_w2": we_w2, "we_b2": we_b2,
        }
        params["blocks"].append(blk)
    return params


def gva_patch_embed_forward(params, points, neighbours):
    coord, feat, offset, condition, context = points
    # TODO(synk): PDNorm adaptive context modulation not implemented
    # (config uses adaptive=False); context is unused.
    N = coord.shape[0]
    C = params["proj_w"].shape[1]
    S = neighbours
    blocks = params["blocks"]
    cp3 = _round_up(3 * C, 128)
    tn, n_pad = _choose_tiling(N)

    idx = _pad_rows(knn_query(S, coord, offset), n_pad, value=-1)   # [Np, S]
    idx_flat = idx.reshape(-1).astype(jnp.int32)    # scalar-prefetched -> SMEM
    mask = (idx >= 0).astype(jnp.float32)                            # [Np, S]
    rowmask = (jnp.arange(n_pad) < N).astype(jnp.float32)[:, None]   # [Np, 1]
    coord_p = _pad_rows(coord, n_pad)
    feat_p = _pad_rows(feat, n_pad)

    # proj_linear (+ masked batch stats for proj_norm)
    h, st = stage_call(feat_p, tn=tn, w=params["proj_w"], rowmask=rowmask)
    norm = _bn_scale_shift(st, N, params["proj_norm_g"][condition],
                           params["proj_norm_b"][condition], EPS_PDNORM)

    feat_b = h1 = st1 = None
    nb = len(blocks)
    for b, blk in enumerate(blocks):
        if b == 0:
            # relu(proj_norm(h)) fused with fc1 of the first block
            feat_b, h1, st1 = stage_call(h, tn=tn, norm=norm, relu=True,
                                         emit_pre=True, w=blk["fc1_w"],
                                         rowmask=rowmask)
        norm1 = _bn_scale_shift(st1, N, blk["norm1_g"][condition],
                                blk["norm1_b"][condition], EPS_PDNORM)
        # relu(norm1(fc1(feat))) -> fused q|k|v projection (one [C, 3C] matmul)
        qkv, st_qkv = stage_call(h1, tn=tn, norm=norm1, relu=True,
                                 w=blk["qkv_w"], b=blk["qkv_b"],
                                 rowmask=rowmask)
        q, table = split_qkv_call(qkv, coord_p,
                                  _qkv_norm(st_qkv, N, blk, C, cp3), C, tn)

        # GroupedVectorAttention (tiled, index-driven gather, 3 passes)
        grp, st_pe = gva1_call(idx_flat, table, coord_p, mask, rowmask,
                               blk["pe1_pack"], S, tn)
        norm_pe = _bn_scale_shift(st_pe, N * S, blk["pe_bn_g"],
                                  blk["pe_bn_b"], EPS_PBN)
        pvec = jnp.concatenate([norm_pe, blk["pe_b2"][None, :]], axis=0)
        vh, st_we = gva2_call(grp, q, rowmask, pvec, blk["pe_w2"],
                              blk["we_w1"], blk["we_b1"].reshape(1, -1), S, tn)
        norm_we = _bn_scale_shift(st_we, N * S, blk["we_bn_g"],
                                  blk["we_bn_b"], EPS_PBN)
        pg = jnp.concatenate([blk["we_w2"], norm_we, blk["we_b2"][None, :]],
                             axis=0)                                 # [G+3, G]
        attn, st_attn = gva3_call(vh, mask, pg, C, tn)

        # relu(norm2(attn)) -> fc3 (+ stats for norm3)
        norm2 = _bn_scale_shift(st_attn, N, blk["norm2_g"][condition],
                                blk["norm2_b"][condition], EPS_PDNORM)
        h3, st3 = stage_call(attn, tn=tn, norm=norm2, relu=True,
                             w=blk["fc3_w"], rowmask=rowmask)
        norm3 = _bn_scale_shift(st3, N, blk["norm3_g"][condition],
                                blk["norm3_b"][condition], EPS_PDNORM)

        # tail: feat = relu(identity + norm3(h3)), fused with the next fc1
        if b + 1 < nb:
            nxt = blocks[b + 1]
            feat_b, h1, st1 = stage_call(h3, tn=tn, norm=norm3,
                                         residual=feat_b, relu=True,
                                         emit_pre=True, w=nxt["fc1_w"],
                                         rowmask=rowmask)
        else:
            (feat_b,) = stage_call(h3, tn=tn, norm=norm3, residual=feat_b,
                                   relu=True, emit_pre=True)
    if nb == 0:
        (feat_b,) = stage_call(h, tn=tn, norm=norm, relu=True, emit_pre=True)
    return [coord, feat_b[:N], offset, condition, context]


if __name__ == "__main__":
    N, IN_CH, C, G, S, DEPTH, NUM_COND = 256, 6, 32, 4, 8, 2, 3
    key = jax.random.PRNGKey(0)
    k1, k2, k3 = jax.random.split(key, 3)
    coord = jax.random.normal(k1, (N, 3), dtype=jnp.float32)
    feat = jax.random.normal(k2, (N, IN_CH), dtype=jnp.float32)
    offset = jnp.array([N], dtype=jnp.int32)        # single point-cloud batch
    condition = 1                                   # per-condition PDNorm index
    context = None

    params = init_params(k3, DEPTH, IN_CH, C, G, NUM_COND)
    out = gva_patch_embed_forward(params, [coord, feat, offset, condition,
                                           context], neighbours=S)
    jax.block_until_ready(out[1])
    assert out[1].shape == (N, C) and out[1].dtype == jnp.float32
    print("KERNEL_OK")
</pallas_src>

<mosaic_0001>
module attributes {stable_mosaic.version = 11 : i64} {
  func.func @kernel(%arg0: i32, %arg1: memref<128x6xf32, #tpu.memory_space<vmem>>, %arg2: memref<6x32xf32, #tpu.memory_space<vmem>>, %arg3: memref<128x1xf32, #tpu.memory_space<vmem>>, %arg4: memref<128x32xf32, #tpu.memory_space<vmem>>, %arg5: memref<1x2x32xf32, #tpu.memory_space<vmem>>) attributes {dimension_semantics = [#tpu.dimension_semantics<parallel>], iteration_bounds = array<i64: 2>, scalar_prefetch = 0 : i64, scratch_operands = 0 : i64, tpu.core_type = #tpu.core_type<tc>, window_params = [{transform_indices = @transform_0, window_bounds = array<i64: 128, 6>}, {pipeline_mode = #tpu.pipeline_mode<synchronous>, transform_indices = @transform_1, window_bounds = array<i64: 6, 32>}, {transform_indices = @transform_2, window_bounds = array<i64: 128, 1>}, {transform_indices = @transform_3, window_bounds = array<i64: 128, 32>}, {transform_indices = @transform_4, window_bounds = array<i64: 1, 2, 32>}]} {
    %c0 = arith.constant 0 : index
    %c0_0 = arith.constant 0 : index
    %0 = vector.load %arg1[%c0, %c0_0] : memref<128x6xf32, #tpu.memory_space<vmem>>, vector<128x6xf32>
    %c0_1 = arith.constant 0 : index
    %c0_2 = arith.constant 0 : index
    %1 = vector.load %arg2[%c0_1, %c0_2] : memref<6x32xf32, #tpu.memory_space<vmem>>, vector<6x32xf32>
    %cst = arith.constant dense<0.000000e+00> : vector<128x32xf32>
    %2 = tpu.matmul %0, %1, %cst {dimension_numbers = #tpu.dot_dimension_numbers<[1], [0], [0], [1], [0, 0, 1, 1], [], []>} : vector<128x6xf32>, vector<6x32xf32>, vector<128x32xf32> -> vector<128x32xf32>
    %c0_3 = arith.constant 0 : index
    %c0_4 = arith.constant 0 : index
    %3 = vector.load %arg4[%c0_3, %c0_4] : memref<128x32xf32, #tpu.memory_space<vmem>>, vector<128x32xf32>
    tpu.vector_store %arg4[%c0_3, %c0_4], %2 {strides = array<i32>} : memref<128x32xf32, #tpu.memory_space<vmem>>, vector<128x32xf32>,
    %c0_5 = arith.constant 0 : index
    %c0_6 = arith.constant 0 : index
    %4 = vector.load %arg3[%c0_5, %c0_6] : memref<128x1xf32, #tpu.memory_space<vmem>>, vector<128x1xf32>
    %5 = vector.broadcast %4 : vector<128x1xf32> to vector<128x32xf32>
    %6 = arith.mulf %2, %5 : vector<128x32xf32>
    %cst_7 = arith.constant dense<0.000000e+00> : vector<32xf32>
    %7 = vector.multi_reduction <add>, %6, %cst_7 [0] : vector<128x32xf32> to vector<32xf32>
    %8 = vector.shape_cast %7 : vector<32xf32> to vector<1x32xf32>
    %9 = arith.mulf %6, %6 : vector<128x32xf32>
    %cst_8 = arith.constant dense<0.000000e+00> : vector<32xf32>
    %10 = vector.multi_reduction <add>, %9, %cst_8 [0] : vector<128x32xf32> to vector<32xf32>
    %11 = vector.shape_cast %10 : vector<32xf32> to vector<1x32xf32>
    %12 = tpu.concatenate %8, %11 in 0 : vector<1x32xf32>, vector<1x32xf32> -> vector<2x32xf32>
    %c0_9 = arith.constant 0 : index
    %c0_10 = arith.constant 0 : index
    %c0_11 = arith.constant 0 : index
    %13 = vector.load %arg5[%c0_9, %c0_10, %c0_11] : memref<1x2x32xf32, #tpu.memory_space<vmem>>, vector<1x2x32xf32>
    %14 = vector.shape_cast %13 : vector<1x2x32xf32> to vector<2x32xf32>
    %15 = vector.shape_cast %12 : vector<2x32xf32> to vector<1x2x32xf32>
    tpu.vector_store %arg5[%c0_9, %c0_10, %c0_11], %15 {strides = array<i32>} : memref<1x2x32xf32, #tpu.memory_space<vmem>>, vector<1x2x32xf32>,
    return
  }
  func.func @transform_0(%arg0: i32) -> (i32, i32) {
    %c0_i32 = arith.constant 0 : i32
    %c0_i32_0 = arith.constant 0 : i32
    return %arg0, %c0_i32 : i32, i32
  }
  func.func @transform_1(%arg0: i32) -> (i32, i32) {
    %c0_i32 = arith.constant 0 : i32
    %c0_i32_0 = arith.constant 0 : i32
    %c0_i32_1 = arith.constant 0 : i32
    return %c0_i32, %c0_i32_0 : i32, i32
  }
  func.func @transform_2(%arg0: i32) -> (i32, i32) {
    %c0_i32 = arith.constant 0 : i32
    %c0_i32_0 = arith.constant 0 : i32
    return %arg0, %c0_i32 : i32, i32
  }
  func.func @transform_3(%arg0: i32) -> (i32, i32) {
    %c0_i32 = arith.constant 0 : i32
    %c0_i32_0 = arith.constant 0 : i32
    return %arg0, %c0_i32 : i32, i32
  }
  func.func @transform_4(%arg0: i32) -> (i32, i32, i32) {
    %c0_i32 = arith.constant 0 : i32
    %c0_i32_0 = arith.constant 0 : i32
    %c0_i32_1 = arith.constant 0 : i32
    return %arg0, %c0_i32, %c0_i32_0 : i32, i32, i32
  }
}

</mosaic_0001>

<llo_original>
// kernel: tpu_custom_call.1
$region0: #{tpu_custom_call.1}
  #allocation0 [shape = 'u32[]', space=smem, size = 0x4, offset = 0x4, fixed_abs, tag = 'smem constant byte address 0x4 - core index']
  #allocation1 [shape = 'u32[144,128]{1,0:T(1,128)}', space=vmem, size = 0x12000, scoped, tag = 'internal scratch']
  %s0 = inlined_call_operand.hbm [shape: f32[256,6], index: 0, kind: input, shape index: {}]
  %s1 = inlined_call_operand.hbm [shape: f32[6,32], index: 1, kind: input, shape index: {}]
  %s2 = inlined_call_operand.hbm [shape: f32[256,1], index: 2, kind: input, shape index: {}]
  %s3 = inlined_call_operand.hbm [shape: f32[256,32], index: 3, kind: output, shape index: {0}]
  %s4 = inlined_call_operand.hbm [shape: f32[2,2,32], index: 4, kind: output, shape index: {1}]
  %5 = xla_tuple %s3, %s4
  %s6 = sld [smem:[#allocation0]]
  $region65: #{tpu_custom_call.1} parent=0
    _
  %s8 = ssub.s32 1, %s6
  %s9 = scalar_select 0, %s8, %s6
  $region1: #{tpu_custom_call.1} parent=0
    #allocation2 [shape = 'u8[131072]{0}', space=vmem, size = 0x20000, scoped, tag = 'input window, operand 0']
    #allocation3 [shape = 's32[2]{0}', space=sflag, size = 0x8, scoped, tag = 'scoped memory for tpu_custom_call.1']
    #allocation4 [shape = 's32[2]{0}', space=sflag, size = 0x8, scoped, tag = 'scoped memory for tpu_custom_call.1']
    #allocation5 [shape = 'u8[4096]{0}', space=vmem, size = 0x1000, scoped, tag = 'input window, operand 1, single buffered']
    #allocation6 [shape = 's32[1]{0}', space=sflag, size = 0x4, scoped, tag = 'scoped memory for tpu_custom_call.1']
    #allocation7 [shape = 'u8[131072]{0}', space=vmem, size = 0x20000, scoped, tag = 'input window, operand 2']
    #allocation8 [shape = 'u8[131072]{0}', space=vmem, size = 0x20000, scoped, tag = 'output window, operand 0']
    #allocation9 [shape = 'u8[2048]{0}', space=vmem, size = 0x800, scoped, tag = 'output window, operand 1']
    #allocation10 [shape = 's32[2]{0}', space=sflag, size = 0x8, scoped, tag = 'scoped memory for tpu_custom_call.1']
    %10 = vsyncpa [#allocation3], 0
    %s11 = scalar_lea.sflag [#allocation3], 1
    %12 = vsyncpa %s11, 0
    %13 = vsyncpa [#allocation6], 0
    %14 = vsyncpa [#allocation4], 0
    %s15 = scalar_lea.sflag [#allocation4], 1
    %16 = vsyncpa %s15, 0
    %17 = vsyncpa [#allocation10], 0
    %s18 = scalar_lea.sflag [#allocation10], 1
    %19 = vsyncpa %s18, 0
    loop: start=0, step=1, limit=4
    $region2: #{tpu_custom_call.1} parent=1 // loop_pre_header
      _
    $region3: #{tpu_custom_call.1} parent=1 // loop_header
      %s21 = sphi 0, %s25
      %p22 = scmp.ge.s32.totalorder %s21, 4
      %s31 = sphi 0, %s33
      %s34 = sphi 0, %s31
      %s35 = sphi 0, %s34
      %s51 = sphi 0, %s35
      %s55 = sphi 0, %s55
      %s57 = sphi 0, %s55
      %s58 = sphi 0, %s57
      %s72 = sphi 0, %s58
      %s78 = sphi 0, %s80
      %s81 = sphi 0, %s78
      %s82 = sphi 0, %s81
      %s98 = sphi 0, %s82
      %s104 = sphi 0, %s106
      %s107 = sphi 0, %s104
      %s108 = sphi 0, %s107
      %s124 = sphi 0, %s108
      %s130 = sphi 0, %s132
      %s133 = sphi 0, %s130
      %s134 = sphi 0, %s133
      %s150 = sphi 0, %s134
    $region4: #{tpu_custom_call.1} parent=1 // loop_header_branch
      %24 = sbr.rel (%p22) target = $region8
    $region5: #{tpu_custom_call.1} parent=1 // loop_body
      %s26 = ssub.s32 %s21, 1
      %s27 = ssub.s32 %s21, 2
      %s28 = sadd.s32 %s21, 1
      %s29 = ssub.s32 %s21, %s28
      %p30 = scmp.eq.s32.totalorder %s29, 0
      %s32 = sadd.s32 %s31, 1
      %s33 = scalar_select %p30, %s31, %s32
      %p36 = pneg %p30
      %p37 = scmp.eq.s32.totalorder %s21, 1
      %p38 = por %p36, %p37
      %p39 = scmp.ne.s32.totalorder %s31, %s34
      %p40 = scmp.eq.s32.totalorder %s21, 0
      %p41 = por %p39, %p40
      %p42 = scmp.ne.s32.totalorder %s31, %s34
      %p43 = scmp.eq.s32.totalorder %s26, 1
      %p44 = por %p42, %p43
      %p45 = scmp.ne.s32.totalorder %s34, %s35
      %p46 = scmp.eq.s32.totalorder %s26, 0
      %p47 = por %p45, %p46
      %p48 = scmp.ne.s32.totalorder %s34, %s35
      %p49 = scmp.eq.s32.totalorder %s27, 1
      %p50 = por %p48, %p49
      %p52 = scmp.ne.s32.totalorder %s35, %s51
      %p53 = scmp.eq.s32.totalorder %s27, 0
      %p54 = por %p52, %p53
      %s56 = sadd.s32 %s55, 1
      %p59 = scmp.eq.s32.totalorder %s21, 1
      %p60 = scmp.ne.s32.totalorder %s55, %s57
      %p61 = scmp.eq.s32.totalorder %s21, 0
      %p62 = por %p60, %p61
      %p63 = scmp.ne.s32.totalorder %s55, %s57
      %p64 = scmp.eq.s32.totalorder %s26, 1
      %p65 = por %p63, %p64
      %p66 = scmp.ne.s32.totalorder %s57, %s58
      %p67 = scmp.eq.s32.totalorder %s26, 0
      %p68 = por %p66, %p67
      %p69 = scmp.ne.s32.totalorder %s57, %s58
      %p70 = scmp.eq.s32.totalorder %s27, 1
      %p71 = por %p69, %p70
      %p73 = scmp.ne.s32.totalorder %s58, %s72
      %p74 = scmp.eq.s32.totalorder %s27, 0
      %p75 = por %p73, %p74
      %s76 = ssub.s32 %s21, %s28
      %p77 = scmp.eq.s32.totalorder %s76, 0
      %s79 = sadd.s32 %s78, 1
      %s80 = scalar_select %p77, %s78, %s79
      %p83 = pneg %p77
      %p84 = scmp.eq.s32.totalorder %s21, 1
      %p85 = por %p83, %p84
      %p86 = scmp.ne.s32.totalorder %s78, %s81
      %p87 = scmp.eq.s32.totalorder %s21, 0
      %p88 = por %p86, %p87
      %p89 = scmp.ne.s32.totalorder %s78, %s81
      %p90 = scmp.eq.s32.totalorder %s26, 1
      %p91 = por %p89, %p90
      %p92 = scmp.ne.s32.totalorder %s81, %s82
      %p93 = scmp.eq.s32.totalorder %s26, 0
      %p94 = por %p92, %p93
      %p95 = scmp.ne.s32.totalorder %s81, %s82
      %p96 = scmp.eq.s32.totalorder %s27, 1
      %p97 = por %p95, %p96
      %p99 = scmp.ne.s32.totalorder %s82, %s98
      %p100 = scmp.eq.s32.totalorder %s27, 0
      %p101 = por %p99, %p100
      %s102 = ssub.s32 %s21, %s28
      %p103 = scmp.eq.s32.totalorder %s102, 0
      %s105 = sadd.s32 %s104, 1
      %s106 = scalar_select %p103, %s104, %s105
      %p109 = pneg %p103
      %p110 = scmp.eq.s32.totalorder %s21, 1
      %p111 = por %p109, %p110
      %p112 = scmp.ne.s32.totalorder %s104, %s107
      %p113 = scmp.eq.s32.totalorder %s21, 0
      %p114 = por %p112, %p113
      %p115 = scmp.ne.s32.totalorder %s104, %s107
      %p116 = scmp.eq.s32.totalorder %s26, 1
      %p117 = por %p115, %p116
      %p118 = scmp.ne.s32.totalorder %s107, %s108
      %p119 = scmp.eq.s32.totalorder %s26, 0
      %p120 = por %p118, %p119
      %p121 = scmp.ne.s32.totalorder %s107, %s108
      %p122 = scmp.eq.s32.totalorder %s27, 1
      %p123 = por %p121, %p122
      %p125 = scmp.ne.s32.totalorder %s108, %s124
      %p126 = scmp.eq.s32.totalorder %s27, 0
      %p127 = por %p125, %p126
      %s128 = ssub.s32 %s21, %s28
      %p129 = scmp.eq.s32.totalorder %s128, 0
      %s131 = sadd.s32 %s130, 1
      %s132 = scalar_select %p129, %s130, %s131
      %p135 = pneg %p129
      %p136 = scmp.eq.s32.totalorder %s21, 1
      %p137 = por %p135, %p136
      %p138 = scmp.ne.s32.totalorder %s130, %s133
      %p139 = scmp.eq.s32.totalorder %s21, 0
      %p140 = por %p138, %p139
      %p141 = scmp.ne.s32.totalorder %s130, %s133
      %p142 = scmp.eq.s32.totalorder %s26, 1
      %p143 = por %p141, %p142
      %p144 = scmp.ne.s32.totalorder %s133, %s134
      %p145 = scmp.eq.s32.totalorder %s26, 0
      %p146 = por %p144, %p145
      %p147 = scmp.ne.s32.totalorder %s133, %s134
      %p148 = scmp.eq.s32.totalorder %s27, 1
      %p149 = por %p147, %p148
      %p151 = scmp.ne.s32.totalorder %s134, %s150
      %p152 = scmp.eq.s32.totalorder %s27, 0
      %p153 = por %p151, %p152
      %p154 = scmp.le.s32.totalorder 1, %s21
      %p155 = scmp.lt.s32.totalorder %s21, 3
      %p156 = pnand %p154, %p155
      %p157 = pneg %p156
      // Predicated region
      $region9: #{tpu_custom_call.1} parent=5 // pred_check
        _
      $region10: #{tpu_custom_call.1} parent=5 // pred_check_branch
        %159 = sbr.rel (%p156) target = $region12
      $region11: #{tpu_custom_call.1} parent=5 // pred_region
        %s160 = ssub.s32 %s21, 1
        // Predicated region
        $region13: #{tpu_custom_call.1} parent=11 // pred_check
          %p161 = pneg %p68
        $region14: #{tpu_custom_call.1} parent=11 // pred_check_branch
          %163 = sbr.rel (%p161) target = $region16
        $region15: #{tpu_custom_call.1} parent=11 // pred_region
          %s165 = ssub.s32 128, 128
          %166 = vsyncadd [#allocation6], %s165
          %s168 = sshll.u32 [#allocation5], 4
          %s169 = int_to_ptr.vmem [resolvable:$true] %s168
          %171 = dma.hbm_to_vmem [thread:$0]  %s1, 128, %s169, [#allocation6]
        $region16: #{tpu_custom_call.1} parent=11 // pred_fallthru
          _
      $region12: #{tpu_custom_call.1} parent=5 // pred_fallthru
        _
      %p172 = scmp.lt.s32.totalorder %s21, 2
      // Predicated region
      $region17: #{tpu_custom_call.1} parent=5 // pred_check
        %p173 = pneg %p172
      $region18: #{tpu_custom_call.1} parent=5 // pred_check_branch
        %175 = sbr.rel (%p173) target = $region20
      $region19: #{tpu_custom_call.1} parent=5 // pred_region
        // Predicated region
        $region21: #{tpu_custom_call.1} parent=19 // pred_check
          %p176 = pneg %p41
        $region22: #{tpu_custom_call.1} parent=19 // pred_check_branch
          %178 = sbr.rel (%p176) target = $region24
        $region23: #{tpu_custom_call.1} parent=19 // pred_region
          %s179 = sand.u32 %s21, 1
          %s180 = scalar_lea.sflag [#allocation3], %s179
          %s181 = sand.u32 %s31, 1
          %s182 = smul.addr %s181, 128
          %s183 = scalar_lea.vmem [#allocation2], %s182
          %s184 = smul.u32 16, %s21
          %s186 = ssub.s32 2048, 2048
          %187 = vsyncadd %s180, %s186
          %s188 = smul.addr %s184, 128
          %s189 = scalar_lea.hbm %s0, %s188
          %s190 = sshll.u32 %s183, 4
          %s191 = int_to_ptr.vmem [resolvable:$true] %s190
          %196 = dma.hbm_to_vmem [thread:$0]  %s189, 2048, %s191, %s180, 128, 128, 8
        $region24: #{tpu_custom_call.1} parent=19 // pred_fallthru
          _
        // Predicated region
        $region25: #{tpu_custom_call.1} parent=19 // pred_check
          %p197 = pneg %p88
        $region26: #{tpu_custom_call.1} parent=19 // pred_check_branch
          %199 = sbr.rel (%p197) target = $region28
        $region27: #{tpu_custom_call.1} parent=19 // pred_region
          %s200 = sand.u32 %s21, 1
          %s201 = scalar_lea.sflag [#allocation3], %s200
          %s202 = sand.u32 %s78, 1
          %s203 = smul.addr %s202, 128
          %s204 = scalar_lea.vmem [#allocation7], %s203
          %s205 = smul.u32 16, %s21
          %s207 = ssub.s32 2048, 2048
          %208 = vsyncadd %s201, %s207
          %s209 = smul.addr %s205, 128
          %s210 = scalar_lea.hbm %s2, %s209
          %s211 = sshll.u32 %s204, 4
          %s212 = int_to_ptr.vmem [resolvable:$true] %s211
          %217 = dma.hbm_to_vmem [thread:$0]  %s210, 2048, %s212, %s201, 128, 128, 8
        $region28: #{tpu_custom_call.1} parent=19 // pred_fallthru
          _
      $region20: #{tpu_custom_call.1} parent=5 // pred_fallthru
        _
      %p218 = scmp.le.s32.totalorder 1, %s21
      %p219 = scmp.lt.s32.totalorder %s21, 3
      %p220 = pnand %p218, %p219
      %p221 = pneg %p220
      // Predicated region
      $region29: #{tpu_custom_call.1} parent=5 // pred_check
        _
      $region30: #{tpu_custom_call.1} parent=5 // pred_check_branch
        %223 = sbr.rel (%p220) target = $region32
      $region31: #{tpu_custom_call.1} parent=5 // pred_region
        %s224 = ssub.s32 %s21, 1
        %s225 = sand.u32 %s26, 1
        %s226 = scalar_lea.sflag [#allocation3], %s225
        %s227 = sand.u32 %s34, 1
        %s228 = smul.addr %s227, 128
        %s229 = scalar_lea.vmem [#allocation2], %s228
        // Predicated region
        $region33: #{tpu_custom_call.1} parent=31 // pred_check
          %p230 = pneg %p47
        $region34: #{tpu_custom_call.1} parent=31 // pred_check_branch
          %232 = sbr.rel (%p230) target = $region36
        $region35: #{tpu_custom_call.1} parent=31 // pred_region
          %233 = dma.done %s226, 2048
        $region36: #{tpu_custom_call.1} parent=31 // pred_fallthru
          _
        // Predicated region
        $region37: #{tpu_custom_call.1} parent=31 // pred_check
          %p234 = pneg %p68
        $region38: #{tpu_custom_call.1} parent=31 // pred_check_branch
          %236 = sbr.rel (%p234) target = $region40
        $region39: #{tpu_custom_call.1} parent=31 // pred_region
          %237 = dma.done [#allocation6], 128
        $region40: #{tpu_custom_call.1} parent=31 // pred_fallthru
          _
        %s238 = sand.u32 %s26, 1
        %s239 = scalar_lea.sflag [#allocation3], %s238
        %s240 = sand.u32 %s81, 1
        %s241 = smul.addr %s240, 128
        %s242 = scalar_lea.vmem [#allocation7], %s241
        // Predicated region
        $region41: #{tpu_custom_call.1} parent=31 // pred_check
          %p243 = pneg %p94
        $region42: #{tpu_custom_call.1} parent=31 // pred_check_branch
          %245 = sbr.rel (%p243) target = $region44
        $region43: #{tpu_custom_call.1} parent=31 // pred_region
          %246 = dma.done %s239, 2048
        $region44: #{tpu_custom_call.1} parent=31 // pred_fallthru
          _
        %s247 = sand.u32 %s26, 1
        %s248 = scalar_lea.sflag [#allocation3], %s247
        %s249 = sand.u32 %s34, 1
        %s250 = smul.addr %s249, 128
        %s251 = scalar_lea.vmem [#allocation2], %s250
        %p252 = pneg %p47
        %p253 = pneg %p44
        %p254 = pneg %p68
        %p255 = pneg %p65
        %s256 = sand.u32 %s26, 1
        %s257 = scalar_lea.sflag [#allocation3], %s256
        %s258 = sand.u32 %s81, 1
        %s259 = smul.addr %s258, 128
        %s260 = scalar_lea.vmem [#allocation7], %s259
        %p261 = pneg %p94
        %p262 = pneg %p91
        %p263 = pneg %p120
        %p264 = pneg %p117
        %s265 = sand.u32 %s107, 1
        %s266 = scalar_lea.sflag [#allocation4], %s265
        %s267 = sand.u32 %s107, 1
        %s268 = smul.addr %s267, 128
        %s269 = scalar_lea.vmem [#allocation8], %s268
        %p270 = pneg %p146
        %p271 = pneg %p143
        %s272 = sand.u32 %s133, 1
        %s273 = scalar_lea.sflag [#allocation10], %s272
        %s274 = sand.u32 %s133, 1
        %s275 = smul.addr %s274, 2
        %s276 = scalar_lea.vmem [#allocation9], %s275
        %s277 = smul.u32 16, %s26
        %s278 = smul.u32 16, %s26
        %s279 = smul.u32 16, %s26
        %v280 = vld [vmem:[%s229] sm:$0xff]
        %v281 = vld [vmem:[%s229 + $0x8] sm:$0xff]
        %v282 = vld [vmem:[%s229 + $0x10] sm:$0xff]
        %v283 = vld [vmem:[%s229 + $0x18] sm:$0xff]
        %v284 = vld [vmem:[%s229 + $0x20] sm:$0xff]
        %v285 = vld [vmem:[%s229 + $0x28] sm:$0xff]
        %v286 = vld [vmem:[%s229 + $0x30] sm:$0xff]
        %v287 = vld [vmem:[%s229 + $0x38] sm:$0xff]
        %v288 = vld [vmem:[%s229 + $0x40] sm:$0xff]
        %v289 = vld [vmem:[%s229 + $0x48] sm:$0xff]
        %v290 = vld [vmem:[%s229 + $0x50] sm:$0xff]
        %v291 = vld [vmem:[%s229 + $0x58] sm:$0xff]
        %v292 = vld [vmem:[%s229 + $0x60] sm:$0xff]
        %v293 = vld [vmem:[%s229 + $0x68] sm:$0xff]
        %v294 = vld [vmem:[%s229 + $0x70] sm:$0xff]
        %v295 = vld [vmem:[%s229 + $0x78] sm:$0xff]
        %v296 = vld [vmem:[#allocation5] sm:$0x3f]
        %vm297 = vcmask 48128
        %v299 = vsel %vm297, %v280, 0
        %v302 = vsel %vm297, %v281, 0
        %v305 = vsel %vm297, %v282, 0
        %v308 = vsel %vm297, %v283, 0
        %v311 = vsel %vm297, %v284, 0
        %v314 = vsel %vm297, %v285, 0
        %v317 = vsel %vm297, %v286, 0
        %v320 = vsel %vm297, %v287, 0
        %v323 = vsel %vm297, %v288, 0
        %v326 = vsel %vm297, %v289, 0
        %v329 = vsel %vm297, %v290, 0
        %v332 = vsel %vm297, %v291, 0
        %v335 = vsel %vm297, %v292, 0
        %v338 = vsel %vm297, %v293, 0
        %v341 = vsel %vm297, %v294, 0
        %v344 = vsel %vm297, %v295, 0
        %vm346 = vcmask 1045504
        %v348 = vsel %vm346, %v296, 0
        %350 = vmatprep.subr.mxu0 0.0
        %351 = vmatpush1.msra.mxu0 %v348
        %352 = vmatprep.subr.mxu0 0.0
        %353 = vmatpush1.msra.mxu0 0.0
        %354 = vmatprep.subr.mxu0 0.0
        %355 = vmatpush1.msra.mxu0 0.0
        %356 = vmatprep.subr.mxu0 0.0
        %357 = vmatpush1.msra.mxu0 0.0
        %358 = vmatprep.subr.mxu0 0.0
        %359 = vmatpush1.msra.mxu0 0.0
        %360 = vmatprep.subr.mxu0 0.0
        %361 = vmatpush1.msra.mxu0 0.0
        %362 = vmatprep.subr.mxu0 0.0
        %363 = vmatpush1.msra.mxu0 0.0
        %364 = vmatprep.subr.mxu0 0.0
        %365 = vmatpush1.msra.mxu0 0.0
        %366 = vmatprep.subr.mxu0 0.0
        %367 = vmatpush1.msra.mxu0 0.0
        %368 = vmatprep.subr.mxu0 0.0
        %369 = vmatpush1.msra.mxu0 0.0
        %370 = vmatprep.subr.mxu0 0.0
        %371 = vmatpush1.msra.mxu0 0.0
        %372 = vmatprep.subr.mxu0 0.0
        %373 = vmatpush1.msra.mxu0 0.0
        %374 = vmatprep.subr.mxu0 0.0
        %375 = vmatpush1.msra.mxu0 0.0
        %376 = vmatprep.subr.mxu0 0.0
        %377 = vmatpush1.msra.mxu0 0.0
        %378 = vmatprep.subr.mxu0 0.0
        %379 = vmatpush1.msra.mxu0 0.0
        %380 = vmatprep.subr.mxu0 0.0
        %381 = vmatpush1.msra.mxu0 0.0
        %382 = vmatprep.subr.mxu0 0.0
        %383 = vmatpush1.msra.mxu0 0.0
        %384 = vmatprep.subr.mxu0 0.0
        %385 = vmatpush1.msra.mxu0 0.0
        %386 = vmatprep.subr.mxu0 0.0
        %387 = vmatpush1.msra.mxu0 0.0
        %388 = vmatprep.subr.mxu0 0.0
        %389 = vmatpush1.msra.mxu0 0.0
        %390 = vmatprep.subr.mxu0 0.0
        %391 = vmatpush1.msra.mxu0 0.0
        %392 = vmatprep.subr.mxu0 0.0
        %393 = vmatpush1.msra.mxu0 0.0
        %394 = vmatprep.subr.mxu0 0.0
        %395 = vmatpush1.msra.mxu0 0.0
        %396 = vmatprep.subr.mxu0 0.0
        %397 = vmatpush1.msra.mxu0 0.0
        %398 = vmatprep.subr.mxu0 0.0
        %399 = vmatpush1.msra.mxu0 0.0
        %400 = vmatprep.subr.mxu0 0.0
        %401 = vmatpush1.msra.mxu0 0.0
        %402 = vmatprep.subr.mxu0 0.0
        %403 = vmatpush1.msra.mxu0 0.0
        %404 = vmatprep.subr.mxu0 0.0
        %405 = vmatpush1.msra.mxu0 0.0
        %406 = vmatprep.subr.mxu0 0.0
        %407 = vmatpush1.msra.mxu0 0.0
        %408 = vmatprep.subr.mxu0 0.0
        %409 = vmatpush1.msra.mxu0 0.0
        %410 = vmatprep.subr.mxu0 0.0
        %411 = vmatpush1.msra.mxu0 0.0
        %412 = vmatprep.subr.mxu0 0.0
        %413 = vmatpush1.msra.mxu0 0.0
        %414 = vmatprep.mubr.f32.mxu0 0.0
        %415 = vmatmul.mubr.f32.gmra.mrb[0].mxu0 %v299
        %v416 = vpop.f32.mrb[0].mxu0
        %v417 = vadd.f32 0.0, %v416
        %v418 = vpop.f32.mrb[0].mxu0
        %419 = vmatprep.mubr.f32.mxu0 0.0
        %420 = vmatmul.mubr.f32.gmra.mrb[0].mxu0 %v302
        %v421 = vpop.f32.mrb[0].mxu0
        %v422 = vadd.f32 0.0, %v421
        %v423 = vpop.f32.mrb[0].mxu0
        %424 = vmatprep.mubr.f32.mxu0 0.0
        %425 = vmatmul.mubr.f32.gmra.mrb[0].mxu0 %v305
        %v426 = vpop.f32.mrb[0].mxu0
        %v427 = vadd.f32 0.0, %v426
        %v428 = vpop.f32.mrb[0].mxu0
        %429 = vmatprep.mubr.f32.mxu0 0.0
        %430 = vmatmul.mubr.f32.gmra.mrb[0].mxu0 %v308
        %v431 = vpop.f32.mrb[0].mxu0
        %v432 = vadd.f32 0.0, %v431
        %v433 = vpop.f32.mrb[0].mxu0
        %434 = vmatprep.mubr.f32.mxu0 0.0
        %435 = vmatmul.mubr.f32.gmra.mrb[0].mxu0 %v311
        %v436 = vpop.f32.mrb[0].mxu0
        %v437 = vadd.f32 0.0, %v436
        %v438 = vpop.f32.mrb[0].mxu0
        %439 = vmatprep.mubr.f32.mxu0 0.0
        %440 = vmatmul.mubr.f32.gmra.mrb[0].mxu0 %v314
        %v441 = vpop.f32.mrb[0].mxu0
        %v442 = vadd.f32 0.0, %v441
        %v443 = vpop.f32.mrb[0].mxu0
        %444 = vmatprep.mubr.f32.mxu0 0.0
        %445 = vmatmul.mubr.f32.gmra.mrb[0].mxu0 %v317
        %v446 = vpop.f32.mrb[0].mxu0
        %v447 = vadd.f32 0.0, %v446
        %v448 = vpop.f32.mrb[0].mxu0
        %449 = vmatprep.mubr.f32.mxu0 0.0
        %450 = vmatmul.mubr.f32.gmra.mrb[0].mxu0 %v320
        %v451 = vpop.f32.mrb[0].mxu0
        %v452 = vadd.f32 0.0, %v451
        %v453 = vpop.f32.mrb[0].mxu0
        %454 = vmatprep.mubr.f32.mxu0 0.0
        %455 = vmatmul.mubr.f32.gmra.mrb[0].mxu0 %v323
        %v456 = vpop.f32.mrb[0].mxu0
        %v457 = vadd.f32 0.0, %v456
        %v458 = vpop.f32.mrb[0].mxu0
        %459 = vmatprep.mubr.f32.mxu0 0.0
        %460 = vmatmul.mubr.f32.gmra.mrb[0].mxu0 %v326
        %v461 = vpop.f32.mrb[0].mxu0
        %v462 = vadd.f32 0.0, %v461
        %v463 = vpop.f32.mrb[0].mxu0
        %464 = vmatprep.mubr.f32.mxu0 0.0
        %465 = vmatmul.mubr.f32.gmra.mrb[0].mxu0 %v329
        %v466 = vpop.f32.mrb[0].mxu0
        %v467 = vadd.f32 0.0, %v466
        %v468 = vpop.f32.mrb[0].mxu0
        %469 = vmatprep.mubr.f32.mxu0 0.0
        %470 = vmatmul.mubr.f32.gmra.mrb[0].mxu0 %v332
        %v471 = vpop.f32.mrb[0].mxu0
        %v472 = vadd.f32 0.0, %v471
        %v473 = vpop.f32.mrb[0].mxu0
        %474 = vmatprep.mubr.f32.mxu0 0.0
        %475 = vmatmul.mubr.f32.gmra.mrb[0].mxu0 %v335
        %v476 = vpop.f32.mrb[0].mxu0
        %v477 = vadd.f32 0.0, %v476
        %v478 = vpop.f32.mrb[0].mxu0
        %479 = vmatprep.mubr.f32.mxu0 0.0
        %480 = vmatmul.mubr.f32.gmra.mrb[0].mxu0 %v338
        %v481 = vpop.f32.mrb[0].mxu0
        %v482 = vadd.f32 0.0, %v481
        %v483 = vpop.f32.mrb[0].mxu0
        %484 = vmatprep.mubr.f32.mxu0 0.0
        %485 = vmatmul.mubr.f32.gmra.mrb[0].mxu0 %v341
        %v486 = vpop.f32.mrb[0].mxu0
        %v487 = vadd.f32 0.0, %v486
        %v488 = vpop.f32.mrb[0].mxu0
        %489 = vmatprep.mubr.f32.mxu0 0.0
        %490 = vmatmul.mubr.f32.gmra.mrb[0].mxu0 %v344
        %v491 = vpop.f32.mrb[0].mxu0
        %v492 = vadd.f32 0.0, %v491
        %v493 = vpop.f32.mrb[0].mxu0
        %494 = vdwg.mxu0
        %vm495 = vcmask 261120
        %496 = vst.msk [vmem:[%s269] sm:$0xff] %vm495, %v417
        %497 = vst.msk [vmem:[%s269 + $0x8] sm:$0xff] %vm495, %v422
        %498 = vst.msk [vmem:[%s269 + $0x10] sm:$0xff] %vm495, %v427
        %499 = vst.msk [vmem:[%s269 + $0x18] sm:$0xff] %vm495, %v432
        %500 = vst.msk [vmem:[%s269 + $0x20] sm:$0xff] %vm495, %v437
        %501 = vst.msk [vmem:[%s269 + $0x28] sm:$0xff] %vm495, %v442
        %502 = vst.msk [vmem:[%s269 + $0x30] sm:$0xff] %vm495, %v447
        %503 = vst.msk [vmem:[%s269 + $0x38] sm:$0xff] %vm495, %v452
        %504 = vst.msk [vmem:[%s269 + $0x40] sm:$0xff] %vm495, %v457
        %505 = vst.msk [vmem:[%s269 + $0x48] sm:$0xff] %vm495, %v462
        %506 = vst.msk [vmem:[%s269 + $0x50] sm:$0xff] %vm495, %v467
        %507 = vst.msk [vmem:[%s269 + $0x58] sm:$0xff] %vm495, %v472
        %508 = vst.msk [vmem:[%s269 + $0x60] sm:$0xff] %vm495, %v477
        %509 = vst.msk [vmem:[%s269 + $0x68] sm:$0xff] %vm495, %v482
        %510 = vst.msk [vmem:[%s269 + $0x70] sm:$0xff] %vm495, %v487
        %511 = vst.msk [vmem:[%s269 + $0x78] sm:$0xff] %vm495, %v492
        %v512 = vld [vmem:[%s242] sm:$0xff]
        %v513 = vld [vmem:[%s242 + $0x8] sm:$0xff]
        %v514 = vld [vmem:[%s242 + $0x10] sm:$0xff]
        %v515 = vld [vmem:[%s242 + $0x18] sm:$0xff]
        %v516 = vld [vmem:[%s242 + $0x20] sm:$0xff]
        %v517 = vld [vmem:[%s242 + $0x28] sm:$0xff]
        %v518 = vld [vmem:[%s242 + $0x30] sm:$0xff]
        %v519 = vld [vmem:[%s242 + $0x38] sm:$0xff]
        %v520 = vld [vmem:[%s242 + $0x40] sm:$0xff]
        %v521 = vld [vmem:[%s242 + $0x48] sm:$0xff]
        %v522 = vld [vmem:[%s242 + $0x50] sm:$0xff]
        %v523 = vld [vmem:[%s242 + $0x58] sm:$0xff]
        %v524 = vld [vmem:[%s242 + $0x60] sm:$0xff]
        %v525 = vld [vmem:[%s242 + $0x68] sm:$0xff]
        %v526 = vld [vmem:[%s242 + $0x70] sm:$0xff]
        %v527 = vld [vmem:[%s242 + $0x78] sm:$0xff]
        %529 = vset.pattern.permute.xlu0 0
        %530 = vperm.xlu0 %529, %v512
        %v531 = vpop.permute.xlu0 %530
        %534 = vset.pattern.permute.xlu0 0
        %535 = vperm.xlu0 %534, %v513
        %v536 = vpop.permute.xlu0 %535
        %539 = vset.pattern.permute.xlu0 0
        %540 = vperm.xlu0 %539, %v514
        %v541 = vpop.permute.xlu0 %540
        %544 = vset.pattern.permute.xlu0 0
        %545 = vperm.xlu0 %544, %v515
        %v546 = vpop.permute.xlu0 %545
        %549 = vset.pattern.permute.xlu0 0
        %550 = vperm.xlu0 %549, %v516
        %v551 = vpop.permute.xlu0 %550
        %554 = vset.pattern.permute.xlu0 0
        %555 = vperm.xlu0 %554, %v517
        %v556 = vpop.permute.xlu0 %555
        %559 = vset.pattern.permute.xlu0 0
        %560 = vperm.xlu0 %559, %v518
        %v561 = vpop.permute.xlu0 %560
        %564 = vset.pattern.permute.xlu0 0
        %565 = vperm.xlu0 %564, %v519
        %v566 = vpop.permute.xlu0 %565
        %569 = vset.pattern.permute.xlu0 0
        %570 = vperm.xlu0 %569, %v520
        %v571 = vpop.permute.xlu0 %570
        %574 = vset.pattern.permute.xlu0 0
        %575 = vperm.xlu0 %574, %v521
        %v576 = vpop.permute.xlu0 %575
        %579 = vset.pattern.permute.xlu0 0
        %580 = vperm.xlu0 %579, %v522
        %v581 = vpop.permute.xlu0 %580
        %584 = vset.pattern.permute.xlu0 0
        %585 = vperm.xlu0 %584, %v523
        %v586 = vpop.permute.xlu0 %585
        %589 = vset.pattern.permute.xlu0 0
        %590 = vperm.xlu0 %589, %v524
        %v591 = vpop.permute.xlu0 %590
        %594 = vset.pattern.permute.xlu0 0
        %595 = vperm.xlu0 %594, %v525
        %v596 = vpop.permute.xlu0 %595
        %599 = vset.pattern.permute.xlu0 0
        %600 = vperm.xlu0 %599, %v526
        %v601 = vpop.permute.xlu0 %600
        %604 = vset.pattern.permute.xlu0 0
        %605 = vperm.xlu0 %604, %v527
        %v606 = vpop.permute.xlu0 %605
        %v608 = vmul.f32 %v417, %v531
        %v609 = vmul.f32 %v422, %v536
        %v610 = vmul.f32 %v427, %v541
        %v611 = vmul.f32 %v432, %v546
        %v612 = vmul.f32 %v437, %v551
        %v613 = vmul.f32 %v442, %v556
        %v614 = vmul.f32 %v447, %v561
        %v615 = vmul.f32 %v452, %v566
        %v616 = vmul.f32 %v457, %v571
        %v617 = vmul.f32 %v462, %v576
        %v618 = vmul.f32 %v467, %v581
        %v619 = vmul.f32 %v472, %v586
        %v620 = vmul.f32 %v477, %v591
        %v621 = vmul.f32 %v482, %v596
        %v622 = vmul.f32 %v487, %v601
        %v623 = vmul.f32 %v492, %v606
        %v624 = vsel %vm495, %v608, 0.0
        %v625 = vsel %vm495, %v609, 0.0
        %v626 = vadd.f32 %v624, %v625
        %v627 = vsel %vm495, %v610, 0.0
        %v628 = vadd.f32 %v626, %v627
        %v629 = vsel %vm495, %v611, 0.0
        %v630 = vadd.f32 %v628, %v629
        %v631 = vsel %vm495, %v612, 0.0
        %v632 = vadd.f32 %v630, %v631
        %v633 = vsel %vm495, %v613, 0.0
        %v634 = vadd.f32 %v632, %v633
        %v635 = vsel %vm495, %v614, 0.0
        %v636 = vadd.f32 %v634, %v635
        %v637 = vsel %vm495, %v615, 0.0
        %v638 = vadd.f32 %v636, %v637
        %v639 = vsel %vm495, %v616, 0.0
        %v640 = vadd.f32 %v638, %v639
        %v641 = vsel %vm495, %v617, 0.0
        %v642 = vadd.f32 %v640, %v641
        %v643 = vsel %vm495, %v618, 0.0
        %v644 = vadd.f32 %v642, %v643
        %v645 = vsel %vm495, %v619, 0.0
        %v646 = vadd.f32 %v644, %v645
        %v647 = vsel %vm495, %v620, 0.0
        %v648 = vadd.f32 %v646, %v647
        %v649 = vsel %vm495, %v621, 0.0
        %v650 = vadd.f32 %v648, %v649
        %v651 = vsel %vm495, %v622, 0.0
        %v652 = vadd.f32 %v650, %v651
        %v653 = vsel %vm495, %v623, 0.0
        %v654 = vadd.f32 %v652, %v653
        %v655 = vrot.slane %v654, 4
        %v656 = vadd.f32 %v654, %v655
        %v657 = vrot.slane %v656, 2
        %v658 = vadd.f32 %v656, %v657
        %v659 = vrot.slane %v658, 1
        %v660 = vadd.f32 %v658, %v659
        %v661 = vmul.f32 %v608, %v608
        %v662 = vmul.f32 %v609, %v609
        %v663 = vmul.f32 %v610, %v610
        %v664 = vmul.f32 %v611, %v611
        %v665 = vmul.f32 %v612, %v612
        %v666 = vmul.f32 %v613, %v613
        %v667 = vmul.f32 %v614, %v614
        %v668 = vmul.f32 %v615, %v615
        %v669 = vmul.f32 %v616, %v616
        %v670 = vmul.f32 %v617, %v617
        %v671 = vmul.f32 %v618, %v618
        %v672 = vmul.f32 %v619, %v619
        %v673 = vmul.f32 %v620, %v620
        %v674 = vmul.f32 %v621, %v621
        %v675 = vmul.f32 %v622, %v622
        %v676 = vmul.f32 %v623, %v623
        %v677 = vsel %vm495, %v661, 0.0
        %v678 = vsel %vm495, %v662, 0.0
        %v679 = vadd.f32 %v677, %v678
        %v680 = vsel %vm495, %v663, 0.0
        %v681 = vadd.f32 %v679, %v680
        %v682 = vsel %vm495, %v664, 0.0
        %v683 = vadd.f32 %v681, %v682
        %v684 = vsel %vm495, %v665, 0.0
        %v685 = vadd.f32 %v683, %v684
        %v686 = vsel %vm495, %v666, 0.0
        %v687 = vadd.f32 %v685, %v686
        %v688 = vsel %vm495, %v667, 0.0
        %v689 = vadd.f32 %v687, %v688
        %v690 = vsel %vm495, %v668, 0.0
        %v691 = vadd.f32 %v689, %v690
        %v692 = vsel %vm495, %v669, 0.0
        %v693 = vadd.f32 %v691, %v692
        %v694 = vsel %vm495, %v670, 0.0
        %v695 = vadd.f32 %v693, %v694
        %v696 = vsel %vm495, %v671, 0.0
        %v697 = vadd.f32 %v695, %v696
        %v698 = vsel %vm495, %v672, 0.0
        %v699 = vadd.f32 %v697, %v698
        %v700 = vsel %vm495, %v673, 0.0
        %v701 = vadd.f32 %v699, %v700
        %v702 = vsel %vm495, %v674, 0.0
        %v703 = vadd.f32 %v701, %v702
        %v704 = vsel %vm495, %v675, 0.0
        %v705 = vadd.f32 %v703, %v704
        %v706 = vsel %vm495, %v676, 0.0
        %v707 = vadd.f32 %v705, %v706
        %v708 = vrot.slane %v707, 4
        %v709 = vadd.f32 %v707, %v708
        %v710 = vrot.slane %v709, 2
        %v711 = vadd.f32 %v709, %v710
        %v712 = vrot.slane %v711, 1
        %v713 = vadd.f32 %v711, %v712
        %vm714 = vcmask 1040384
        %v715 = vsel %vm714, %v660, %v713
        %vm716 = vcmask 254976
        %717 = vst.msk [vmem:[%s276] sm:$0x3] %vm716, %v715
        %s718 = sand.u32 %s107, 1
        %s719 = scalar_lea.sflag [#allocation4], %s718
        %s720 = sand.u32 %s107, 1
        %s721 = smul.addr %s720, 128
        %s722 = scalar_lea.vmem [#allocation8], %s721
        %s723 = sand.u32 %s133, 1
        %s724 = scalar_lea.sflag [#allocation10], %s723
        %s725 = sand.u32 %s133, 1
        %s726 = smul.addr %s725, 2
        %s727 = scalar_lea.vmem [#allocation9], %s726
        // Predicated region
        $region45: #{tpu_custom_call.1} parent=31 // pred_check
          %p728 = pneg %p117
        $region46: #{tpu_custom_call.1} parent=31 // pred_check_branch
          %730 = sbr.rel (%p728) target = $region48
        $region47: #{tpu_custom_call.1} parent=31 // pred_region
          %s731 = smul.u32 16, %s26
          %s733 = ssub.s32 2048, 2048
          %734 = vsyncadd %s719, %s733
          %s735 = smul.addr %s731, 128
          %s736 = scalar_lea.hbm %s3, %s735
          %s737 = sshll.u32 %s722, 4
          %s738 = int_to_ptr.vmem [resolvable:$true] %s737
          %743 = dma.vmem_to_hbm [thread:$0]  %s738, 2048, %s736, %s719, 128, 128, 8
        $region48: #{tpu_custom_call.1} parent=31 // pred_fallthru
          _
        // Predicated region
        $region49: #{tpu_custom_call.1} parent=31 // pred_check
          %p744 = pneg %p143
        $region50: #{tpu_custom_call.1} parent=31 // pred_check_branch
          %746 = sbr.rel (%p744) target = $region52
        $region51: #{tpu_custom_call.1} parent=31 // pred_region
          %s748 = ssub.s32 32, 32
          %749 = vsyncadd %s724, %s748
          %s750 = smul.addr %s26, 32
          %s751 = scalar_lea.hbm %s4, %s750
          %s753 = sshll.u32 %s727, 4
          %s754 = int_to_ptr.vmem [resolvable:$true] %s753
          %756 = dma.vmem_to_hbm [thread:$0]  %s754, 32, %s751, %s724
        $region52: #{tpu_custom_call.1} parent=31 // pred_fallthru
          _
      $region32: #{tpu_custom_call.1} parent=5 // pred_fallthru
        _
      %p757 = scmp.le.s32.totalorder 2, %s21
      // Predicated region
      $region53: #{tpu_custom_call.1} parent=5 // pred_check
        %p758 = pneg %p757
      $region54: #{tpu_custom_call.1} parent=5 // pred_check_branch
        %760 = sbr.rel (%p758) target = $region56
      $region55: #{tpu_custom_call.1} parent=5 // pred_region
        %s761 = ssub.s32 %s21, 2
        // Predicated region
        $region57: #{tpu_custom_call.1} parent=55 // pred_check
          %p762 = pneg %p123
        $region58: #{tpu_custom_call.1} parent=55 // pred_check_branch
          %764 = sbr.rel (%p762) target = $region60
        $region59: #{tpu_custom_call.1} parent=55 // pred_region
          %s765 = sand.u32 %s108, 1
          %s766 = scalar_lea.sflag [#allocation4], %s765
          %s767 = sand.u32 %s108, 1
          %s768 = smul.addr %s767, 128
          %s769 = scalar_lea.vmem [#allocation8], %s768
          %770 = dma.done %s766, 2048
        $region60: #{tpu_custom_call.1} parent=55 // pred_fallthru
          _
        // Predicated region
        $region61: #{tpu_custom_call.1} parent=55 // pred_check
          %p771 = pneg %p149
        $region62: #{tpu_custom_call.1} parent=55 // pred_check_branch
          %773 = sbr.rel (%p771) target = $region64
        $region63: #{tpu_custom_call.1} parent=55 // pred_region
          %s774 = sand.u32 %s134, 1
          %s775 = scalar_lea.sflag [#allocation10], %s774
          %s776 = sand.u32 %s134, 1
          %s777 = smul.addr %s776, 2
          %s778 = scalar_lea.vmem [#allocation9], %s777
          %779 = dma.done %s775, 32
        $region64: #{tpu_custom_call.1} parent=55 // pred_fallthru
          _
      $region56: #{tpu_custom_call.1} parent=5 // pred_fallthru
        _
    $region6: #{tpu_custom_call.1} parent=1 // loop_footer
      %s25 = sadd.s32 1, %s21
    $region7: #{tpu_custom_call.1} parent=1 // loop_footer_branch
      %20 = sbr.rel target = $region3
    $region8: #{tpu_custom_call.1} parent=1 // loop_exit
      _
    %780 = vsyncpa [#allocation3], 1
    %s781 = scalar_lea.sflag [#allocation3], 1
    %782 = vsyncpa %s781, 1
    %783 = vsyncpa [#allocation6], 1
    %784 = vsyncpa [#allocation4], 1
    %s785 = scalar_lea.sflag [#allocation4], 1
    %786 = vsyncpa %s785, 1
    %787 = vsyncpa [#allocation10], 1
    %s788 = scalar_lea.sflag [#allocation10], 1
    %789 = vsyncpa %s788, 1

</llo_original>
